<compile_context>
chip_gen: v6e
topology: v6e:2x2x1
jax: 0.10.0
libtpu: 0.0.40
codegen_flags: <defaults>
</compile_context>

<pallas_src>
import functools

import numpy as np
import jax
import jax.numpy as jnp
from jax import lax
from jax.experimental import pallas as pl
from jax.experimental.pallas import tpu as pltpu


def _round_up(x, m):
    return ((x + m - 1) // m) * m


def _pad2d(x, rows, cols):
    r, c = x.shape
    if r == rows and c == cols:
        return x
    return jnp.pad(x, ((0, rows - r), (0, cols - c)))


def _cos_sim_tile(aa_ref, wa_ref, ab_ref, wb_ref, out_ref, threshold, eps):
    # EmbeddingWeight: elementwise multiply by the learned weight (VPU).
    a = aa_ref[...] * wa_ref[...]                       # (TM, D) f32
    b = ab_ref[...] * wb_ref[...]                       # (TN, D) f32
    # cos_sim row normalization, exactly the module's semantics:
    #   x / max(||x||, eps) == x * rsqrt(max(||x||^2, eps^2))
    # rsqrt runs on the EUP slot, off the VALU critical path.
    inv_a = lax.rsqrt(jnp.maximum(jnp.sum(a * a, axis=1, keepdims=True), eps * eps))
    inv_b = lax.rsqrt(jnp.maximum(jnp.sum(b * b, axis=1, keepdims=True), eps * eps))
    a_n = (a * inv_a).astype(jnp.bfloat16)
    b_n = (b * inv_b).astype(jnp.bfloat16)
    # Contract the last dim of both operands (no explicit transpose); bf16 MXU
    # inputs, f32 accumulation.
    s = lax.dot_general(a_n, b_n,
                        dimension_numbers=(((1,), (1,)), ((), ())),
                        preferred_element_type=jnp.float32)
    # torch.where(s < thr, zeros, s) with a scalar 0 (no broadcast materialize).
    out_ref[...] = jnp.where(s < threshold, 0.0, s)


def _cos_sim_kernel(aa_ref, wa_ref, ab_ref, wb_ref, out_ref, *,
                    threshold, eps, symmetric):
    if symmetric:
        i = pl.program_id(0)
        j = pl.program_id(1)

        @pl.when(j >= i)
        def _():
            _cos_sim_tile(aa_ref, wa_ref, ab_ref, wb_ref, out_ref,
                          threshold, eps)

        @pl.when(j < i)
        def _():
            # Lower block-triangle skipped (S_uu is symmetric); mirrored on
            # the host with a cheap follow-up op.
            out_ref[...] = jnp.zeros_like(out_ref)
    else:
        _cos_sim_tile(aa_ref, wa_ref, ab_ref, wb_ref, out_ref, threshold, eps)


def _cos_sim_threshold(attr_a, w_a, attr_b, w_b, threshold, tm, tn, *,
                       symmetric, eps=1e-8):
    m_pad, d_pad = attr_a.shape
    n_pad = attr_b.shape[0]
    grid = (m_pad // tm, n_pad // tn)
    kernel = functools.partial(_cos_sim_kernel, threshold=float(threshold),
                               eps=float(eps), symmetric=symmetric)
    return pl.pallas_call(
        kernel,
        out_shape=jax.ShapeDtypeStruct((m_pad, n_pad), jnp.float32),
        grid=grid,
        in_specs=[
            # a-stripe: block index depends only on i (outer axis) -> DMA'd
            # once per row stripe, not once per output tile.
            pl.BlockSpec((tm, d_pad), lambda i, j: (i, 0)),
            pl.BlockSpec((tm, d_pad), lambda i, j: (i, 0)),
            pl.BlockSpec((tn, d_pad), lambda i, j: (j, 0)),
            pl.BlockSpec((tn, d_pad), lambda i, j: (j, 0)),
        ],
        out_specs=pl.BlockSpec((tm, tn), lambda i, j: (i, j)),
        compiler_params=pltpu.CompilerParams(
            dimension_semantics=("parallel", "parallel"),
            vmem_limit_bytes=64 * 1024 * 1024),
    )(attr_a, w_a, attr_b, w_b)


def structure_learning_forward(attr1, attr2, w1, w2,
                               threshold_up, threshold_uu, *, tile=256):
    """StructureLearning.forward.

    Returns (edge_uu, edge_up, sim_up, sim_uu):
      edge_uu / edge_up : int (E, 2) numpy arrays of [row, col] indices of the
        surviving (thresholded) similarities (torch.nonzero equivalent).
      sim_up / sim_uu   : dense thresholded cosine-similarity matrices.
    """
    M, D = attr1.shape
    N, D2 = attr2.shape
    assert D == D2 and w1.shape == (M, D) and w2.shape == (N, D)

    # 128-aligned, zero-padded layout (exact: zero rows/cols contribute 0 to
    # norms and dot products and are sliced away below).
    d_pad = _round_up(D, 128)
    tm = min(tile, _round_up(M, 128))
    tn = min(tile, _round_up(N, 128))
    m_pad = _round_up(M, tm)
    n_pad = _round_up(N, tn)

    a1 = _pad2d(jnp.asarray(attr1, jnp.float32), m_pad, d_pad)
    ww1 = _pad2d(jnp.asarray(w1, jnp.float32), m_pad, d_pad)
    a2 = _pad2d(jnp.asarray(attr2, jnp.float32), n_pad, d_pad)
    ww2 = _pad2d(jnp.asarray(w2, jnp.float32), n_pad, d_pad)

    sim_up_p = _cos_sim_threshold(a1, ww1, a2, ww2, threshold_up, tm, tn,
                                  symmetric=False)
    sim_uu_p = _cos_sim_threshold(a1, ww1, a1, ww1, threshold_uu, tm, tm,
                                  symmetric=True)

    # Mirror the lower block-triangle of the (symmetric) user-user similarity
    # that the kernel skipped (j < i tiles were written as zeros).
    blk = jnp.arange(m_pad, dtype=jnp.int32) // tm
    sim_uu_p = jnp.where(blk[:, None] <= blk[None, :], sim_uu_p, sim_uu_p.T)

    sim_up = sim_up_p[:M, :N]
    sim_uu = sim_uu_p[:M, :M]
    jax.block_until_ready((sim_up, sim_uu))

    # torch.nonzero equivalent: data-dependent output shape -> host side.
    # Kept as packed int index arrays (no python list-of-lists loop).
    edge_up = np.argwhere(np.asarray(sim_up) != 0.0)
    edge_uu = np.argwhere(np.asarray(sim_uu) != 0.0)
    # TODO(synk): the PyTorch module appends edges into persistent python
    # lists (self.add_relation_*) across calls and builds merge_entity from
    # JSON files; those stateful / file-I/O side effects are not reproduced.
    return edge_uu, edge_up, sim_up, sim_uu


def xavier_uniform_relu(key, shape):
    """PyTorch nn.init.xavier_uniform_ with gain=calculate_gain('relu')."""
    fan_out, fan_in = shape  # 2-D tensor: fan_in = size(1), fan_out = size(0)
    gain = float(np.sqrt(2.0))
    bound = gain * float(np.sqrt(6.0 / (fan_in + fan_out)))
    return jax.random.uniform(key, shape, jnp.float32, -bound, bound)


if __name__ == "__main__":
    # Small shapes consistent with the module's forward.
    duser, dpost, dvector = 16, 8, 32
    threshold_up, threshold_uu = 0.3, 0.4

    key = jax.random.PRNGKey(0)
    k1, k2, k3, k4 = jax.random.split(key, 4)

    # Module parameters (EmbeddingWeight.weight), deterministic init.
    w1 = xavier_uniform_relu(k1, (duser, dvector))
    w2 = xavier_uniform_relu(k2, (dpost, dvector))

    # Forward inputs (attr1, attr2 were numpy arrays in the PyTorch code).
    attr1 = jax.random.normal(k3, (duser, dvector), jnp.float32)
    attr2 = jax.random.normal(k4, (dpost, dvector), jnp.float32)

    edge_uu, edge_up, sim_up, sim_uu = structure_learning_forward(
        attr1, attr2, w1, w2, threshold_up, threshold_uu)
    jax.block_until_ready((sim_up, sim_uu))

    print("KERNEL_OK")
</pallas_src>

<mosaic_0001>
module attributes {stable_mosaic.version = 11 : i64} {
  func.func @_cos_sim_kernel(%arg0: i32, %arg1: i32, %arg2: memref<128x128xf32, #tpu.memory_space<vmem>>, %arg3: memref<128x128xf32, #tpu.memory_space<vmem>>, %arg4: memref<128x128xf32, #tpu.memory_space<vmem>>, %arg5: memref<128x128xf32, #tpu.memory_space<vmem>>, %arg6: memref<128x128xf32, #tpu.memory_space<vmem>>) attributes {dimension_semantics = [#tpu.dimension_semantics<parallel>, #tpu.dimension_semantics<parallel>], iteration_bounds = array<i64: 1, 1>, scalar_prefetch = 0 : i64, scratch_operands = 0 : i64, tpu.core_type = #tpu.core_type<tc>, window_params = [{transform_indices = @transform_0, window_bounds = array<i64: 128, 128>}, {transform_indices = @transform_1, window_bounds = array<i64: 128, 128>}, {transform_indices = @transform_2, window_bounds = array<i64: 128, 128>}, {transform_indices = @transform_3, window_bounds = array<i64: 128, 128>}, {transform_indices = @transform_4, window_bounds = array<i64: 128, 128>}]} {
    %c0 = arith.constant 0 : index
    %c0_0 = arith.constant 0 : index
    %0 = vector.load %arg2[%c0, %c0_0] : memref<128x128xf32, #tpu.memory_space<vmem>>, vector<128x128xf32>
    %c0_1 = arith.constant 0 : index
    %c0_2 = arith.constant 0 : index
    %1 = vector.load %arg3[%c0_1, %c0_2] : memref<128x128xf32, #tpu.memory_space<vmem>>, vector<128x128xf32>
    %2 = arith.mulf %0, %1 : vector<128x128xf32>
    %c0_3 = arith.constant 0 : index
    %c0_4 = arith.constant 0 : index
    %3 = vector.load %arg4[%c0_3, %c0_4] : memref<128x128xf32, #tpu.memory_space<vmem>>, vector<128x128xf32>
    %c0_5 = arith.constant 0 : index
    %c0_6 = arith.constant 0 : index
    %4 = vector.load %arg5[%c0_5, %c0_6] : memref<128x128xf32, #tpu.memory_space<vmem>>, vector<128x128xf32>
    %5 = arith.mulf %3, %4 : vector<128x128xf32>
    %6 = arith.mulf %2, %2 : vector<128x128xf32>
    %cst = arith.constant dense<0.000000e+00> : vector<128xf32>
    %7 = vector.multi_reduction <add>, %6, %cst [1] : vector<128x128xf32> to vector<128xf32>
    %8 = vector.shape_cast %7 : vector<128xf32> to vector<128x1xf32>
    %cst_7 = arith.constant 1.000000e-16 : f32
    %9 = vector.broadcast %cst_7 : f32 to vector<128x1xf32>
    %10 = arith.maximumf %8, %9 : vector<128x1xf32>
    %11 = math.rsqrt %10 : vector<128x1xf32>
    %12 = arith.mulf %5, %5 : vector<128x128xf32>
    %cst_8 = arith.constant dense<0.000000e+00> : vector<128xf32>
    %13 = vector.multi_reduction <add>, %12, %cst_8 [1] : vector<128x128xf32> to vector<128xf32>
    %14 = vector.shape_cast %13 : vector<128xf32> to vector<128x1xf32>
    %cst_9 = arith.constant 1.000000e-16 : f32
    %15 = vector.broadcast %cst_9 : f32 to vector<128x1xf32>
    %16 = arith.maximumf %14, %15 : vector<128x1xf32>
    %17 = math.rsqrt %16 : vector<128x1xf32>
    %18 = vector.broadcast %11 : vector<128x1xf32> to vector<128x128xf32>
    %19 = arith.mulf %2, %18 : vector<128x128xf32>
    %20 = arith.truncf %19 : vector<128x128xf32> to vector<128x128xbf16>
    %21 = vector.broadcast %17 : vector<128x1xf32> to vector<128x128xf32>
    %22 = arith.mulf %5, %21 : vector<128x128xf32>
    %23 = arith.truncf %22 : vector<128x128xf32> to vector<128x128xbf16>
    %cst_10 = arith.constant dense<0.000000e+00> : vector<128x128xf32>
    %24 = tpu.matmul %20, %23, %cst_10 {dimension_numbers = #tpu.dot_dimension_numbers<[1], [1], [0], [0], [0, 0, 1, 0], [], []>} : vector<128x128xbf16>, vector<128x128xbf16>, vector<128x128xf32> -> vector<128x128xf32>
    %cst_11 = arith.constant 3.000000e-01 : f32
    %25 = vector.broadcast %cst_11 : f32 to vector<128x128xf32>
    %26 = arith.cmpf olt, %24, %25 : vector<128x128xf32>
    %cst_12 = arith.constant 0.000000e+00 : f32
    %27 = vector.broadcast %cst_12 : f32 to vector<128x128xf32>
    %28 = arith.select %26, %27, %24 : vector<128x128xi1>, vector<128x128xf32>
    %c0_13 = arith.constant 0 : index
    %c0_14 = arith.constant 0 : index
    %29 = vector.load %arg6[%c0_13, %c0_14] : memref<128x128xf32, #tpu.memory_space<vmem>>, vector<128x128xf32>
    tpu.vector_store %arg6[%c0_13, %c0_14], %28 {strides = array<i32>} : memref<128x128xf32, #tpu.memory_space<vmem>>, vector<128x128xf32>,
    return
  }
  func.func @transform_0(%arg0: i32, %arg1: i32) -> (i32, i32) {
    %c0_i32 = arith.constant 0 : i32
    %c0_i32_0 = arith.constant 0 : i32
    return %arg0, %c0_i32 : i32, i32
  }
  func.func @transform_1(%arg0: i32, %arg1: i32) -> (i32, i32) {
    %c0_i32 = arith.constant 0 : i32
    %c0_i32_0 = arith.constant 0 : i32
    return %arg0, %c0_i32 : i32, i32
  }
  func.func @transform_2(%arg0: i32, %arg1: i32) -> (i32, i32) {
    %c0_i32 = arith.constant 0 : i32
    %c0_i32_0 = arith.constant 0 : i32
    return %arg1, %c0_i32 : i32, i32
  }
  func.func @transform_3(%arg0: i32, %arg1: i32) -> (i32, i32) {
    %c0_i32 = arith.constant 0 : i32
    %c0_i32_0 = arith.constant 0 : i32
    return %arg1, %c0_i32 : i32, i32
  }
  func.func @transform_4(%arg0: i32, %arg1: i32) -> (i32, i32) {
    %c0_i32 = arith.constant 0 : i32
    return %arg0, %arg1 : i32, i32
  }
}

</mosaic_0001>

<llo_original>
// kernel: tpu_custom_call.1
$region0: #{tpu_custom_call.1}
  #allocation0 [shape = 'u32[]', space=smem, size = 0x4, offset = 0x4, fixed_abs, tag = 'smem constant byte address 0x4 - core index']
  #allocation1 [shape = 'u32[144,128]{1,0:T(1,128)}', space=vmem, size = 0x12000, scoped, tag = 'internal scratch']
  %s0 = inlined_call_operand.hbm [shape: f32[128,128], index: 0, kind: input, shape index: {}]
  %s1 = inlined_call_operand.hbm [shape: f32[128,128], index: 1, kind: input, shape index: {}]
  %s2 = inlined_call_operand.hbm [shape: f32[128,128], index: 2, kind: input, shape index: {}]
  %s3 = inlined_call_operand.hbm [shape: f32[128,128], index: 3, kind: input, shape index: {}]
  %s4 = inlined_call_operand.hbm [shape: f32[128,128], index: 4, kind: output, shape index: {}]
  %s5 = sld [smem:[#allocation0]]
  $region42: #{tpu_custom_call.1} parent=0
    _
  %s7 = ssub.s32 1, %s5
  %s8 = scalar_select 0, %s7, %s5
  $region1: #{tpu_custom_call.1} parent=0
    #allocation2 [shape = 'u8[65536]{0}', space=vmem, size = 0x10000, scoped, tag = 'input window, operand 0, single buffered']
    #allocation3 [shape = 's32[1]{0}', space=sflag, size = 0x4, scoped, tag = 'scoped memory for tpu_custom_call.1']
    #allocation4 [shape = 's32[1]{0}', space=sflag, size = 0x4, scoped, tag = 'scoped memory for tpu_custom_call.1']
    #allocation5 [shape = 'u8[65536]{0}', space=vmem, size = 0x10000, scoped, tag = 'input window, operand 1, single buffered']
    #allocation6 [shape = 's32[1]{0}', space=sflag, size = 0x4, scoped, tag = 'scoped memory for tpu_custom_call.1']
    #allocation7 [shape = 'u8[65536]{0}', space=vmem, size = 0x10000, scoped, tag = 'input window, operand 2, single buffered']
    #allocation8 [shape = 'u8[65536]{0}', space=vmem, size = 0x10000, scoped, tag = 'input window, operand 3, single buffered']
    #allocation9 [shape = 's32[1]{0}', space=sflag, size = 0x4, scoped, tag = 'scoped memory for tpu_custom_call.1']
    #allocation10 [shape = 'u8[65536]{0}', space=vmem, size = 0x10000, scoped, tag = 'output window, operand 0, single buffered']
    %9 = vsyncpa [#allocation3], 0
    %10 = vsyncpa [#allocation6], 0
    %11 = vsyncpa [#allocation9], 0
    %12 = vsyncpa [#allocation4], 0
    // Predicated region
    $region2: #{tpu_custom_call.1} parent=1 // pred_check
      _
    $region3: #{tpu_custom_call.1} parent=1 // pred_check_branch
      %14 = sbr.rel (0) target = $region5
    $region4: #{tpu_custom_call.1} parent=1 // pred_region
      %s16 = ssub.s32 2048, 2048
      %17 = vsyncadd [#allocation3], %s16
      %s18 = sshll.u32 [#allocation2], 4
      %s19 = int_to_ptr.vmem [resolvable:$true] %s18
      %24 = dma.hbm_to_vmem [thread:$0]  %s0, 2048, %s19, [#allocation3], 128, 128, 8
    $region5: #{tpu_custom_call.1} parent=1 // pred_fallthru
      _
    // Predicated region
    $region6: #{tpu_custom_call.1} parent=1 // pred_check
      _
    $region7: #{tpu_custom_call.1} parent=1 // pred_check_branch
      %26 = sbr.rel (0) target = $region9
    $region8: #{tpu_custom_call.1} parent=1 // pred_region
      %s28 = ssub.s32 2048, 2048
      %29 = vsyncadd [#allocation6], %s28
      %s30 = sshll.u32 [#allocation5], 4
      %s31 = int_to_ptr.vmem [resolvable:$true] %s30
      %36 = dma.hbm_to_vmem [thread:$0]  %s1, 2048, %s31, [#allocation6], 128, 128, 8
    $region9: #{tpu_custom_call.1} parent=1 // pred_fallthru
      _
    // Predicated region
    $region10: #{tpu_custom_call.1} parent=1 // pred_check
      _
    $region11: #{tpu_custom_call.1} parent=1 // pred_check_branch
      %38 = sbr.rel (0) target = $region13
    $region12: #{tpu_custom_call.1} parent=1 // pred_region
      %s40 = ssub.s32 2048, 2048
      %41 = vsyncadd [#allocation6], %s40
      %s42 = sshll.u32 [#allocation7], 4
      %s43 = int_to_ptr.vmem [resolvable:$true] %s42
      %48 = dma.hbm_to_vmem [thread:$0]  %s2, 2048, %s43, [#allocation6], 128, 128, 8
    $region13: #{tpu_custom_call.1} parent=1 // pred_fallthru
      _
    // Predicated region
    $region14: #{tpu_custom_call.1} parent=1 // pred_check
      _
    $region15: #{tpu_custom_call.1} parent=1 // pred_check_branch
      %50 = sbr.rel (0) target = $region17
    $region16: #{tpu_custom_call.1} parent=1 // pred_region
      %s52 = ssub.s32 2048, 2048
      %53 = vsyncadd [#allocation9], %s52
      %s54 = sshll.u32 [#allocation8], 4
      %s55 = int_to_ptr.vmem [resolvable:$true] %s54
      %60 = dma.hbm_to_vmem [thread:$0]  %s3, 2048, %s55, [#allocation9], 128, 128, 8
    $region17: #{tpu_custom_call.1} parent=1 // pred_fallthru
      _
    // Predicated region
    $region18: #{tpu_custom_call.1} parent=1 // pred_check
      _
    $region19: #{tpu_custom_call.1} parent=1 // pred_check_branch
      %62 = sbr.rel (0) target = $region21
    $region20: #{tpu_custom_call.1} parent=1 // pred_region
      %63 = dma.done [#allocation3], 2048
    $region21: #{tpu_custom_call.1} parent=1 // pred_fallthru
      _
    // Predicated region
    $region22: #{tpu_custom_call.1} parent=1 // pred_check
      _
    $region23: #{tpu_custom_call.1} parent=1 // pred_check_branch
      %65 = sbr.rel (0) target = $region25
    $region24: #{tpu_custom_call.1} parent=1 // pred_region
      %66 = dma.done [#allocation6], 2048
    $region25: #{tpu_custom_call.1} parent=1 // pred_fallthru
      _
    // Predicated region
    $region26: #{tpu_custom_call.1} parent=1 // pred_check
      _
    $region27: #{tpu_custom_call.1} parent=1 // pred_check_branch
      %68 = sbr.rel (0) target = $region29
    $region28: #{tpu_custom_call.1} parent=1 // pred_region
      %69 = dma.done [#allocation6], 2048
    $region29: #{tpu_custom_call.1} parent=1 // pred_fallthru
      _
    // Predicated region
    $region30: #{tpu_custom_call.1} parent=1 // pred_check
      _
    $region31: #{tpu_custom_call.1} parent=1 // pred_check_branch
      %71 = sbr.rel (0) target = $region33
    $region32: #{tpu_custom_call.1} parent=1 // pred_region
      %72 = dma.done [#allocation9], 2048
    $region33: #{tpu_custom_call.1} parent=1 // pred_fallthru
      _
    %v74 = vld [vmem:[#allocation2] sm:$0xff]
    %v75 = vld [vmem:[#allocation2 + $0x8] sm:$0xff]
    %v76 = vld [vmem:[#allocation2 + $0x10] sm:$0xff]
    %v77 = vld [vmem:[#allocation2 + $0x18] sm:$0xff]
    %v78 = vld [vmem:[#allocation2 + $0x20] sm:$0xff]
    %v79 = vld [vmem:[#allocation2 + $0x28] sm:$0xff]
    %v80 = vld [vmem:[#allocation2 + $0x30] sm:$0xff]
    %v81 = vld [vmem:[#allocation2 + $0x38] sm:$0xff]
    %v82 = vld [vmem:[#allocation2 + $0x40] sm:$0xff]
    %v83 = vld [vmem:[#allocation2 + $0x48] sm:$0xff]
    %v84 = vld [vmem:[#allocation2 + $0x50] sm:$0xff]
    %v85 = vld [vmem:[#allocation2 + $0x58] sm:$0xff]
    %v86 = vld [vmem:[#allocation2 + $0x60] sm:$0xff]
    %v87 = vld [vmem:[#allocation2 + $0x68] sm:$0xff]
    %v88 = vld [vmem:[#allocation2 + $0x70] sm:$0xff]
    %v89 = vld [vmem:[#allocation2 + $0x78] sm:$0xff]
    %v90 = vld [vmem:[#allocation5] sm:$0xff]
    %v91 = vld [vmem:[#allocation5 + $0x8] sm:$0xff]
    %v92 = vld [vmem:[#allocation5 + $0x10] sm:$0xff]
    %v93 = vld [vmem:[#allocation5 + $0x18] sm:$0xff]
    %v94 = vld [vmem:[#allocation5 + $0x20] sm:$0xff]
    %v95 = vld [vmem:[#allocation5 + $0x28] sm:$0xff]
    %v96 = vld [vmem:[#allocation5 + $0x30] sm:$0xff]
    %v97 = vld [vmem:[#allocation5 + $0x38] sm:$0xff]
    %v98 = vld [vmem:[#allocation5 + $0x40] sm:$0xff]
    %v99 = vld [vmem:[#allocation5 + $0x48] sm:$0xff]
    %v100 = vld [vmem:[#allocation5 + $0x50] sm:$0xff]
    %v101 = vld [vmem:[#allocation5 + $0x58] sm:$0xff]
    %v102 = vld [vmem:[#allocation5 + $0x60] sm:$0xff]
    %v103 = vld [vmem:[#allocation5 + $0x68] sm:$0xff]
    %v104 = vld [vmem:[#allocation5 + $0x70] sm:$0xff]
    %v105 = vld [vmem:[#allocation5 + $0x78] sm:$0xff]
    %v106 = vmul.f32 %v74, %v90
    %v107 = vmul.f32 %v75, %v91
    %v108 = vmul.f32 %v76, %v92
    %v109 = vmul.f32 %v77, %v93
    %v110 = vmul.f32 %v78, %v94
    %v111 = vmul.f32 %v79, %v95
    %v112 = vmul.f32 %v80, %v96
    %v113 = vmul.f32 %v81, %v97
    %v114 = vmul.f32 %v82, %v98
    %v115 = vmul.f32 %v83, %v99
    %v116 = vmul.f32 %v84, %v100
    %v117 = vmul.f32 %v85, %v101
    %v118 = vmul.f32 %v86, %v102
    %v119 = vmul.f32 %v87, %v103
    %v120 = vmul.f32 %v88, %v104
    %v121 = vmul.f32 %v89, %v105
    %v122 = vld [vmem:[#allocation7] sm:$0xff]
    %v123 = vld [vmem:[#allocation7 + $0x8] sm:$0xff]
    %v124 = vld [vmem:[#allocation7 + $0x10] sm:$0xff]
    %v125 = vld [vmem:[#allocation7 + $0x18] sm:$0xff]
    %v126 = vld [vmem:[#allocation7 + $0x20] sm:$0xff]
    %v127 = vld [vmem:[#allocation7 + $0x28] sm:$0xff]
    %v128 = vld [vmem:[#allocation7 + $0x30] sm:$0xff]
    %v129 = vld [vmem:[#allocation7 + $0x38] sm:$0xff]
    %v130 = vld [vmem:[#allocation7 + $0x40] sm:$0xff]
    %v131 = vld [vmem:[#allocation7 + $0x48] sm:$0xff]
    %v132 = vld [vmem:[#allocation7 + $0x50] sm:$0xff]
    %v133 = vld [vmem:[#allocation7 + $0x58] sm:$0xff]
    %v134 = vld [vmem:[#allocation7 + $0x60] sm:$0xff]
    %v135 = vld [vmem:[#allocation7 + $0x68] sm:$0xff]
    %v136 = vld [vmem:[#allocation7 + $0x70] sm:$0xff]
    %v137 = vld [vmem:[#allocation7 + $0x78] sm:$0xff]
    %v138 = vld [vmem:[#allocation8] sm:$0xff]
    %v139 = vld [vmem:[#allocation8 + $0x8] sm:$0xff]
    %v140 = vld [vmem:[#allocation8 + $0x10] sm:$0xff]
    %v141 = vld [vmem:[#allocation8 + $0x18] sm:$0xff]
    %v142 = vld [vmem:[#allocation8 + $0x20] sm:$0xff]
    %v143 = vld [vmem:[#allocation8 + $0x28] sm:$0xff]
    %v144 = vld [vmem:[#allocation8 + $0x30] sm:$0xff]
    %v145 = vld [vmem:[#allocation8 + $0x38] sm:$0xff]
    %v146 = vld [vmem:[#allocation8 + $0x40] sm:$0xff]
    %v147 = vld [vmem:[#allocation8 + $0x48] sm:$0xff]
    %v148 = vld [vmem:[#allocation8 + $0x50] sm:$0xff]
    %v149 = vld [vmem:[#allocation8 + $0x58] sm:$0xff]
    %v150 = vld [vmem:[#allocation8 + $0x60] sm:$0xff]
    %v151 = vld [vmem:[#allocation8 + $0x68] sm:$0xff]
    %v152 = vld [vmem:[#allocation8 + $0x70] sm:$0xff]
    %v153 = vld [vmem:[#allocation8 + $0x78] sm:$0xff]
    %v154 = vmul.f32 %v122, %v138
    %v155 = vmul.f32 %v123, %v139
    %v156 = vmul.f32 %v124, %v140
    %v157 = vmul.f32 %v125, %v141
    %v158 = vmul.f32 %v126, %v142
    %v159 = vmul.f32 %v127, %v143
    %v160 = vmul.f32 %v128, %v144
    %v161 = vmul.f32 %v129, %v145
    %v162 = vmul.f32 %v130, %v146
    %v163 = vmul.f32 %v131, %v147
    %v164 = vmul.f32 %v132, %v148
    %v165 = vmul.f32 %v133, %v149
    %v166 = vmul.f32 %v134, %v150
    %v167 = vmul.f32 %v135, %v151
    %v168 = vmul.f32 %v136, %v152
    %v169 = vmul.f32 %v137, %v153
    %v170 = vmul.f32 %v106, %v106
    %v171 = vmul.f32 %v107, %v107
    %v172 = vmul.f32 %v108, %v108
    %v173 = vmul.f32 %v109, %v109
    %v174 = vmul.f32 %v110, %v110
    %v175 = vmul.f32 %v111, %v111
    %v176 = vmul.f32 %v112, %v112
    %v177 = vmul.f32 %v113, %v113
    %v178 = vmul.f32 %v114, %v114
    %v179 = vmul.f32 %v115, %v115
    %v180 = vmul.f32 %v116, %v116
    %v181 = vmul.f32 %v117, %v117
    %v182 = vmul.f32 %v118, %v118
    %v183 = vmul.f32 %v119, %v119
    %v184 = vmul.f32 %v120, %v120
    %v185 = vmul.f32 %v121, %v121
    %186 = vadd.xlane.f32.xlu0 %v170
    %v187 = vpop.xlane.xlu0 %186
    %188 = vadd.xlane.f32.xlu0 %v171
    %v189 = vpop.xlane.xlu0 %188
    %190 = vadd.xlane.f32.xlu0 %v172
    %v191 = vpop.xlane.xlu0 %190
    %192 = vadd.xlane.f32.xlu0 %v173
    %v193 = vpop.xlane.xlu0 %192
    %194 = vadd.xlane.f32.xlu0 %v174
    %v195 = vpop.xlane.xlu0 %194
    %196 = vadd.xlane.f32.xlu0 %v175
    %v197 = vpop.xlane.xlu0 %196
    %198 = vadd.xlane.f32.xlu0 %v176
    %v199 = vpop.xlane.xlu0 %198
    %200 = vadd.xlane.f32.xlu0 %v177
    %v201 = vpop.xlane.xlu0 %200
    %202 = vadd.xlane.f32.xlu0 %v178
    %v203 = vpop.xlane.xlu0 %202
    %204 = vadd.xlane.f32.xlu0 %v179
    %v205 = vpop.xlane.xlu0 %204
    %206 = vadd.xlane.f32.xlu0 %v180
    %v207 = vpop.xlane.xlu0 %206
    %208 = vadd.xlane.f32.xlu0 %v181
    %v209 = vpop.xlane.xlu0 %208
    %210 = vadd.xlane.f32.xlu0 %v182
    %v211 = vpop.xlane.xlu0 %210
    %212 = vadd.xlane.f32.xlu0 %v183
    %v213 = vpop.xlane.xlu0 %212
    %214 = vadd.xlane.f32.xlu0 %v184
    %v215 = vpop.xlane.xlu0 %214
    %216 = vadd.xlane.f32.xlu0 %v185
    %v217 = vpop.xlane.xlu0 %216
    %v218 = vmax.f32 %v187, 1e-16
    %v219 = vmax.f32 %v189, 1e-16
    %v220 = vmax.f32 %v191, 1e-16
    %v221 = vmax.f32 %v193, 1e-16
    %v222 = vmax.f32 %v195, 1e-16
    %v223 = vmax.f32 %v197, 1e-16
    %v224 = vmax.f32 %v199, 1e-16
    %v225 = vmax.f32 %v201, 1e-16
    %v226 = vmax.f32 %v203, 1e-16
    %v227 = vmax.f32 %v205, 1e-16
    %v228 = vmax.f32 %v207, 1e-16
    %v229 = vmax.f32 %v209, 1e-16
    %v230 = vmax.f32 %v211, 1e-16
    %v231 = vmax.f32 %v213, 1e-16
    %v232 = vmax.f32 %v215, 1e-16
    %v233 = vmax.f32 %v217, 1e-16
    %v234 = vrsqrt.pop %v218
    %v235 = vrsqrt.pop %v219
    %v236 = vrsqrt.pop %v220
    %v237 = vrsqrt.pop %v221
    %v238 = vrsqrt.pop %v222
    %v239 = vrsqrt.pop %v223
    %v240 = vrsqrt.pop %v224
    %v241 = vrsqrt.pop %v225
    %v242 = vrsqrt.pop %v226
    %v243 = vrsqrt.pop %v227
    %v244 = vrsqrt.pop %v228
    %v245 = vrsqrt.pop %v229
    %v246 = vrsqrt.pop %v230
    %v247 = vrsqrt.pop %v231
    %v248 = vrsqrt.pop %v232
    %v249 = vrsqrt.pop %v233
    %v250 = vmul.f32 %v154, %v154
    %v251 = vmul.f32 %v155, %v155
    %v252 = vmul.f32 %v156, %v156
    %v253 = vmul.f32 %v157, %v157
    %v254 = vmul.f32 %v158, %v158
    %v255 = vmul.f32 %v159, %v159
    %v256 = vmul.f32 %v160, %v160
    %v257 = vmul.f32 %v161, %v161
    %v258 = vmul.f32 %v162, %v162
    %v259 = vmul.f32 %v163, %v163
    %v260 = vmul.f32 %v164, %v164
    %v261 = vmul.f32 %v165, %v165
    %v262 = vmul.f32 %v166, %v166
    %v263 = vmul.f32 %v167, %v167
    %v264 = vmul.f32 %v168, %v168
    %v265 = vmul.f32 %v169, %v169
    %266 = vadd.xlane.f32.xlu0 %v250
    %v267 = vpop.xlane.xlu0 %266
    %268 = vadd.xlane.f32.xlu0 %v251
    %v269 = vpop.xlane.xlu0 %268
    %270 = vadd.xlane.f32.xlu0 %v252
    %v271 = vpop.xlane.xlu0 %270
    %272 = vadd.xlane.f32.xlu0 %v253
    %v273 = vpop.xlane.xlu0 %272
    %274 = vadd.xlane.f32.xlu0 %v254
    %v275 = vpop.xlane.xlu0 %274
    %276 = vadd.xlane.f32.xlu0 %v255
    %v277 = vpop.xlane.xlu0 %276
    %278 = vadd.xlane.f32.xlu0 %v256
    %v279 = vpop.xlane.xlu0 %278
    %280 = vadd.xlane.f32.xlu0 %v257
    %v281 = vpop.xlane.xlu0 %280
    %282 = vadd.xlane.f32.xlu0 %v258
    %v283 = vpop.xlane.xlu0 %282
    %284 = vadd.xlane.f32.xlu0 %v259
    %v285 = vpop.xlane.xlu0 %284
    %286 = vadd.xlane.f32.xlu0 %v260
    %v287 = vpop.xlane.xlu0 %286
    %288 = vadd.xlane.f32.xlu0 %v261
    %v289 = vpop.xlane.xlu0 %288
    %290 = vadd.xlane.f32.xlu0 %v262
    %v291 = vpop.xlane.xlu0 %290
    %292 = vadd.xlane.f32.xlu0 %v263
    %v293 = vpop.xlane.xlu0 %292
    %294 = vadd.xlane.f32.xlu0 %v264
    %v295 = vpop.xlane.xlu0 %294
    %296 = vadd.xlane.f32.xlu0 %v265
    %v297 = vpop.xlane.xlu0 %296
    %v298 = vmax.f32 %v267, 1e-16
    %v299 = vmax.f32 %v269, 1e-16
    %v300 = vmax.f32 %v271, 1e-16
    %v301 = vmax.f32 %v273, 1e-16
    %v302 = vmax.f32 %v275, 1e-16
    %v303 = vmax.f32 %v277, 1e-16
    %v304 = vmax.f32 %v279, 1e-16
    %v305 = vmax.f32 %v281, 1e-16
    %v306 = vmax.f32 %v283, 1e-16
    %v307 = vmax.f32 %v285, 1e-16
    %v308 = vmax.f32 %v287, 1e-16
    %v309 = vmax.f32 %v289, 1e-16
    %v310 = vmax.f32 %v291, 1e-16
    %v311 = vmax.f32 %v293, 1e-16
    %v312 = vmax.f32 %v295, 1e-16
    %v313 = vmax.f32 %v297, 1e-16
    %v314 = vrsqrt.pop %v298
    %v315 = vrsqrt.pop %v299
    %v316 = vrsqrt.pop %v300
    %v317 = vrsqrt.pop %v301
    %v318 = vrsqrt.pop %v302
    %v319 = vrsqrt.pop %v303
    %v320 = vrsqrt.pop %v304
    %v321 = vrsqrt.pop %v305
    %v322 = vrsqrt.pop %v306
    %v323 = vrsqrt.pop %v307
    %v324 = vrsqrt.pop %v308
    %v325 = vrsqrt.pop %v309
    %v326 = vrsqrt.pop %v310
    %v327 = vrsqrt.pop %v311
    %v328 = vrsqrt.pop %v312
    %v329 = vrsqrt.pop %v313
    %v330 = vmul.f32 %v106, %v234
    %v331 = vmul.f32 %v107, %v235
    %v332 = vmul.f32 %v108, %v236
    %v333 = vmul.f32 %v109, %v237
    %v334 = vmul.f32 %v110, %v238
    %v335 = vmul.f32 %v111, %v239
    %v336 = vmul.f32 %v112, %v240
    %v337 = vmul.f32 %v113, %v241
    %v338 = vmul.f32 %v114, %v242
    %v339 = vmul.f32 %v115, %v243
    %v340 = vmul.f32 %v116, %v244
    %v341 = vmul.f32 %v117, %v245
    %v342 = vmul.f32 %v118, %v246
    %v343 = vmul.f32 %v119, %v247
    %v344 = vmul.f32 %v120, %v248
    %v345 = vmul.f32 %v121, %v249
    %v346 = vpack.c.bf16 %v331, %v330
    %v347 = vpack.c.bf16 %v333, %v332
    %v348 = vpack.c.bf16 %v335, %v334
    %v349 = vpack.c.bf16 %v337, %v336
    %v350 = vpack.c.bf16 %v339, %v338
    %v351 = vpack.c.bf16 %v341, %v340
    %v352 = vpack.c.bf16 %v343, %v342
    %v353 = vpack.c.bf16 %v345, %v344
    %v354 = vmul.f32 %v154, %v314
    %v355 = vmul.f32 %v155, %v315
    %v356 = vmul.f32 %v156, %v316
    %v357 = vmul.f32 %v157, %v317
    %v358 = vmul.f32 %v158, %v318
    %v359 = vmul.f32 %v159, %v319
    %v360 = vmul.f32 %v160, %v320
    %v361 = vmul.f32 %v161, %v321
    %v362 = vmul.f32 %v162, %v322
    %v363 = vmul.f32 %v163, %v323
    %v364 = vmul.f32 %v164, %v324
    %v365 = vmul.f32 %v165, %v325
    %v366 = vmul.f32 %v166, %v326
    %v367 = vmul.f32 %v167, %v327
    %v368 = vmul.f32 %v168, %v328
    %v369 = vmul.f32 %v169, %v329
    %v370 = vpack.c.bf16 %v355, %v354
    %v371 = vpack.c.bf16 %v357, %v356
    %v372 = vpack.c.bf16 %v359, %v358
    %v373 = vpack.c.bf16 %v361, %v360
    %v374 = vpack.c.bf16 %v363, %v362
    %v375 = vpack.c.bf16 %v365, %v364
    %v376 = vpack.c.bf16 %v367, %v366
    %v377 = vpack.c.bf16 %v369, %v368
    %378 = vmatprep.subr.bf16.mxu0 0
    %379 = vmatpush1.bf16.xpose.msra.mxu0 %v377
    %380 = vmatprep.subr.bf16.mxu0 0
    %381 = vmatpush1.bf16.xpose.msra.mxu0 %v376
    %382 = vmatprep.subr.bf16.mxu0 0
    %383 = vmatpush1.bf16.xpose.msra.mxu0 %v375
    %384 = vmatprep.subr.bf16.mxu0 0
    %385 = vmatpush1.bf16.xpose.msra.mxu0 %v374
    %386 = vmatprep.subr.bf16.mxu0 0
    %387 = vmatpush1.bf16.xpose.msra.mxu0 %v373
    %388 = vmatprep.subr.bf16.mxu0 0
    %389 = vmatpush1.bf16.xpose.msra.mxu0 %v372
    %390 = vmatprep.subr.bf16.mxu0 0
    %391 = vmatpush1.bf16.xpose.msra.mxu0 %v371
    %392 = vmatprep.subr.bf16.mxu0 0
    %393 = vmatpush1.bf16.xpose.msra.mxu0 %v370
    %394 = vmatprep.subr.bf16.mxu0 0
    %395 = vmatpush2.bf16.xpose.msra.mxu0 0
    %396 = vmatprep.subr.bf16.mxu0 0
    %397 = vmatpush2.bf16.xpose.msra.mxu0 0
    %398 = vmatprep.subr.bf16.mxu0 0
    %399 = vmatpush2.bf16.xpose.msra.mxu0 0
    %400 = vmatprep.subr.bf16.mxu0 0
    %401 = vmatpush2.bf16.xpose.msra.mxu0 0
    %402 = vmatprep.subr.bf16.mxu0 0
    %403 = vmatpush2.bf16.xpose.msra.mxu0 0
    %404 = vmatprep.subr.bf16.mxu0 0
    %405 = vmatpush2.bf16.xpose.msra.mxu0 0
    %406 = vmatprep.subr.bf16.mxu0 0
    %407 = vmatpush2.bf16.xpose.msra.mxu0 0
    %408 = vmatprep.subr.bf16.mxu0 0
    %409 = vmatpush2.bf16.xpose.msra.mxu0 0
    %410 = vmatprep.mubr.bf16.mxu0 0
    %411 = vmatmul.mubr.bf16.gmra.mxu0 %v346
    %v412 = vpop.f32.mrf.mxu0
    %v413 = vadd.f32 0.0, %v412
    %v414 = vpop.f32.mrf.mxu0
    %v415 = vpop.f32.mrf.mxu0
    %v416 = vadd.f32 0.0, %v415
    %v417 = vpop.f32.mrf.mxu0
    %418 = vmatprep.mubr.bf16.mxu0 0
    %419 = vmatmul.mubr.bf16.gmra.mxu0 %v347
    %v420 = vpop.f32.mrf.mxu0
    %v421 = vadd.f32 0.0, %v420
    %v422 = vpop.f32.mrf.mxu0
    %v423 = vpop.f32.mrf.mxu0
    %v424 = vadd.f32 0.0, %v423
    %v425 = vpop.f32.mrf.mxu0
    %426 = vmatprep.mubr.bf16.mxu0 0
    %427 = vmatmul.mubr.bf16.gmra.mxu0 %v348
    %v428 = vpop.f32.mrf.mxu0
    %v429 = vadd.f32 0.0, %v428
    %v430 = vpop.f32.mrf.mxu0
    %v431 = vpop.f32.mrf.mxu0
    %v432 = vadd.f32 0.0, %v431
    %v433 = vpop.f32.mrf.mxu0
    %434 = vmatprep.mubr.bf16.mxu0 0
    %435 = vmatmul.mubr.bf16.gmra.mxu0 %v349
    %v436 = vpop.f32.mrf.mxu0
    %v437 = vadd.f32 0.0, %v436
    %v438 = vpop.f32.mrf.mxu0
    %v439 = vpop.f32.mrf.mxu0
    %v440 = vadd.f32 0.0, %v439
    %v441 = vpop.f32.mrf.mxu0
    %442 = vmatprep.mubr.bf16.mxu0 0
    %443 = vmatmul.mubr.bf16.gmra.mxu0 %v350
    %v444 = vpop.f32.mrf.mxu0
    %v445 = vadd.f32 0.0, %v444
    %v446 = vpop.f32.mrf.mxu0
    %v447 = vpop.f32.mrf.mxu0
    %v448 = vadd.f32 0.0, %v447
    %v449 = vpop.f32.mrf.mxu0
    %450 = vmatprep.mubr.bf16.mxu0 0
    %451 = vmatmul.mubr.bf16.gmra.mxu0 %v351
    %v452 = vpop.f32.mrf.mxu0
    %v453 = vadd.f32 0.0, %v452
    %v454 = vpop.f32.mrf.mxu0
    %v455 = vpop.f32.mrf.mxu0
    %v456 = vadd.f32 0.0, %v455
    %v457 = vpop.f32.mrf.mxu0
    %458 = vmatprep.mubr.bf16.mxu0 0
    %459 = vmatmul.mubr.bf16.gmra.mxu0 %v352
    %v460 = vpop.f32.mrf.mxu0
    %v461 = vadd.f32 0.0, %v460
    %v462 = vpop.f32.mrf.mxu0
    %v463 = vpop.f32.mrf.mxu0
    %v464 = vadd.f32 0.0, %v463
    %v465 = vpop.f32.mrf.mxu0
    %466 = vmatprep.mubr.bf16.mxu0 0
    %467 = vmatmul.mubr.bf16.gmra.mxu0 %v353
    %v468 = vpop.f32.mrf.mxu0
    %v469 = vadd.f32 0.0, %v468
    %v470 = vpop.f32.mrf.mxu0
    %v471 = vpop.f32.mrf.mxu0
    %v472 = vadd.f32 0.0, %v471
    %v473 = vpop.f32.mrf.mxu0
    %474 = vdwg.mxu0
    %vm475 = vcmp.lt.f32.partialorder %v413, 0.3
    %vm476 = vcmp.lt.f32.partialorder %v416, 0.3
    %vm477 = vcmp.lt.f32.partialorder %v421, 0.3
    %vm478 = vcmp.lt.f32.partialorder %v424, 0.3
    %vm479 = vcmp.lt.f32.partialorder %v429, 0.3
    %vm480 = vcmp.lt.f32.partialorder %v432, 0.3
    %vm481 = vcmp.lt.f32.partialorder %v437, 0.3
    %vm482 = vcmp.lt.f32.partialorder %v440, 0.3
    %vm483 = vcmp.lt.f32.partialorder %v445, 0.3
    %vm484 = vcmp.lt.f32.partialorder %v448, 0.3
    %vm485 = vcmp.lt.f32.partialorder %v453, 0.3
    %vm486 = vcmp.lt.f32.partialorder %v456, 0.3
    %vm487 = vcmp.lt.f32.partialorder %v461, 0.3
    %vm488 = vcmp.lt.f32.partialorder %v464, 0.3
    %vm489 = vcmp.lt.f32.partialorder %v469, 0.3
    %vm490 = vcmp.lt.f32.partialorder %v472, 0.3
    %v491 = vsel %vm475, 0.0, %v413
    %v492 = vsel %vm476, 0.0, %v416
    %v493 = vsel %vm477, 0.0, %v421
    %v494 = vsel %vm478, 0.0, %v424
    %v495 = vsel %vm479, 0.0, %v429
    %v496 = vsel %vm480, 0.0, %v432
    %v497 = vsel %vm481, 0.0, %v437
    %v498 = vsel %vm482, 0.0, %v440
    %v499 = vsel %vm483, 0.0, %v445
    %v500 = vsel %vm484, 0.0, %v448
    %v501 = vsel %vm485, 0.0, %v453
    %v502 = vsel %vm486, 0.0, %v456
    %v503 = vsel %vm487, 0.0, %v461
    %v504 = vsel %vm488, 0.0, %v464
    %v505 = vsel %vm489, 0.0, %v469
    %v506 = vsel %vm490, 0.0, %v472
    %507 = vst [vmem:[#allocation10] sm:$0xff] %v491
    %508 = vst [vmem:[#allocation10 + $0x8] sm:$0xff] %v492
    %509 = vst [vmem:[#allocation10 + $0x10] sm:$0xff] %v493
    %510 = vst [vmem:[#allocation10 + $0x18] sm:$0xff] %v494
    %511 = vst [vmem:[#allocation10 + $0x20] sm:$0xff] %v495
    %512 = vst [vmem:[#allocation10 + $0x28] sm:$0xff] %v496
    %513 = vst [vmem:[#allocation10 + $0x30] sm:$0xff] %v497
    %514 = vst [vmem:[#allocation10 + $0x38] sm:$0xff] %v498
    %515 = vst [vmem:[#allocation10 + $0x40] sm:$0xff] %v499
    %516 = vst [vmem:[#allocation10 + $0x48] sm:$0xff] %v500
    %517 = vst [vmem:[#allocation10 + $0x50] sm:$0xff] %v501
    %518 = vst [vmem:[#allocation10 + $0x58] sm:$0xff] %v502
    %519 = vst [vmem:[#allocation10 + $0x60] sm:$0xff] %v503
    %520 = vst [vmem:[#allocation10 + $0x68] sm:$0xff] %v504
    %521 = vst [vmem:[#allocation10 + $0x70] sm:$0xff] %v505
    %522 = vst [vmem:[#allocation10 + $0x78] sm:$0xff] %v506
    // Predicated region
    $region34: #{tpu_custom_call.1} parent=1 // pred_check
      _
    $region35: #{tpu_custom_call.1} parent=1 // pred_check_branch
      %524 = sbr.rel (0) target = $region37
    $region36: #{tpu_custom_call.1} parent=1 // pred_region
      %s526 = ssub.s32 2048, 2048
      %527 = vsyncadd [#allocation4], %s526
      %s528 = sshll.u32 [#allocation10], 4
      %s529 = int_to_ptr.vmem [resolvable:$true] %s528
      %534 = dma.vmem_to_hbm [thread:$0]  %s529, 2048, %s4, [#allocation4], 128, 128, 8
    $region37: #{tpu_custom_call.1} parent=1 // pred_fallthru
      _
    // Predicated region
    $region38: #{tpu_custom_call.1} parent=1 // pred_check
      _
    $region39: #{tpu_custom_call.1} parent=1 // pred_check_branch
      %536 = sbr.rel (0) target = $region41
    $region40: #{tpu_custom_call.1} parent=1 // pred_region
      %537 = dma.done [#allocation4], 2048
    $region41: #{tpu_custom_call.1} parent=1 // pred_fallthru
      _
    %538 = vsyncpa [#allocation3], 1
    %539 = vsyncpa [#allocation6], 1
    %540 = vsyncpa [#allocation9], 1
    %541 = vsyncpa [#allocation4], 1

</llo_original>
